<compile_context>
chip_gen: v6e
topology: v6e:2x2x1
jax: 0.10.0
libtpu: 0.0.40
codegen_flags: <defaults>
</compile_context>

<pallas_src>
import jax
import jax.numpy as jnp
from jax.experimental import pallas as pl
from jax.experimental.pallas import tpu as pltpu

# ---- model dims (small, consistent with the module) ----
OBS = 16           # vector observation size
HIDDEN = 32        # network_settings.hidden_units
NUM_LAYERS = 2     # network_settings.num_layers
ACT = 4            # action_spec.continuous_size
MODEL_EXPORT_VERSION = 3.0

# ---- tiling ----
MAX_TILE_B = 1024  # batch rows per grid step (512-4096 recommended; 1024 keeps
                   # >=2 grid steps on v7x whenever B > 1024)


def _round_up(x, m):
    return ((x + m - 1) // m) * m


def _choose_tile_b(batch):
    """Whole (8-aligned) batch in one tile when small, else MAX_TILE_B rows/step."""
    b8 = _round_up(max(int(batch), 1), 8)
    return b8 if b8 <= MAX_TILE_B else MAX_TILE_B


def simple_actor_kernel(x_ref, w1_ref, b1_ref, w2_ref, b2_ref,
                        wmu_ref, bmu_ref, out_ref):
    """Fused LinearEncoder (2x Linear+Swish) + continuous action head + export clip.

    Matmuls run on the MXU in bf16 with f32 accumulation; Swish stays in f32 on
    the accumulator and its divide goes to the EUP (approx reciprocal).
    """
    x = x_ref[...]                                           # (tile_b, OBS) bf16

    # LinearEncoder layer 1: Linear(OBS -> HIDDEN) + Swish
    h = jnp.dot(x, w1_ref[...], preferred_element_type=jnp.float32) + b1_ref[...]
    h = h * pl.reciprocal(1.0 + jnp.exp(-h), approx=True)    # swish, EUP recip

    # LinearEncoder layer 2: Linear(HIDDEN -> HIDDEN) + Swish
    h = jnp.dot(h.astype(jnp.bfloat16), w2_ref[...],
                preferred_element_type=jnp.float32) + b2_ref[...]
    h = h * pl.reciprocal(1.0 + jnp.exp(-h), approx=True)

    # ActionModel continuous head: mu = Linear(HIDDEN -> ACT)
    mu = jnp.dot(h.astype(jnp.bfloat16), wmu_ref[...],
                 preferred_element_type=jnp.float32) + bmu_ref[...]

    # ONNX export path: clamp(mu, -3, 3) / 3
    out_ref[...] = (jnp.clip(mu, -3.0, 3.0) * (1.0 / 3.0)).astype(out_ref.dtype)


@jax.jit
def simple_actor_forward(obs, params):
    """Returns the SimpleActor.forward export tuple:
       (version_number, memory_size_vector, cont_action_out, continuous_act_size_vector)."""
    w1, b1, w2, b2, wmu, bmu = params
    B = obs.shape[0]

    tile_b = _choose_tile_b(B)
    n_tiles = pl.cdiv(B, tile_b)
    b_pad = n_tiles * tile_b

    # bf16 feed for the MXU; ideally the producer already emits bf16 obs so this
    # cast is a no-op (and under jit it fuses with the tail padding).
    x = obs.astype(jnp.bfloat16)
    if b_pad != B:
        x = jnp.pad(x, ((0, b_pad - B), (0, 0)))             # zero-pad ragged tail
    w1b = w1.astype(jnp.bfloat16)
    w2b = w2.astype(jnp.bfloat16)
    wmub = wmu.astype(jnp.bfloat16)

    cont = pl.pallas_call(
        simple_actor_kernel,
        out_shape=jax.ShapeDtypeStruct((b_pad, ACT), jnp.float32),
        grid_spec=pltpu.PrefetchScalarGridSpec(
            num_scalar_prefetch=0,
            grid=(n_tiles,),                                  # tile over batch only
            in_specs=[
                pl.BlockSpec((tile_b, OBS), lambda i: (i, 0)),       # obs tile (bf16)
                pl.BlockSpec((OBS, HIDDEN), lambda i: (0, 0)),       # W1 (bf16)
                pl.BlockSpec((1, HIDDEN), lambda i: (0, 0)),         # b1 (f32)
                pl.BlockSpec((HIDDEN, HIDDEN), lambda i: (0, 0)),    # W2 (bf16)
                pl.BlockSpec((1, HIDDEN), lambda i: (0, 0)),         # b2 (f32)
                pl.BlockSpec((HIDDEN, ACT), lambda i: (0, 0)),       # Wmu (bf16)
                pl.BlockSpec((1, ACT), lambda i: (0, 0)),            # bmu (f32)
            ],
            out_specs=pl.BlockSpec((tile_b, ACT), lambda i: (i, 0)),
        ),
        compiler_params=pltpu.CompilerParams(
            dimension_semantics=("parallel",)),               # shards across TCs on v7x
    )(x, w1b, b1, w2b, b2, wmub, bmu)

    cont_action_out = cont[:B]                                # drop padded rows

    # Constant export parameters (nn.Parameter buffers in the PyTorch module).
    version_number = jnp.array([MODEL_EXPORT_VERSION], dtype=jnp.float32)
    memory_size_vector = jnp.array([0.0], dtype=jnp.float32)            # no LSTM
    continuous_act_size_vector = jnp.array([float(ACT)], dtype=jnp.float32)
    return (version_number, memory_size_vector,
            cont_action_out, continuous_act_size_vector)


def init_params(key):
    """Deterministic synthetic init; weights stored as (in, out)."""
    k1, k2, k3 = jax.random.split(key, 3)
    w1 = jax.random.normal(k1, (OBS, HIDDEN), jnp.float32) * (2.0 / OBS) ** 0.5
    b1 = jnp.zeros((1, HIDDEN), jnp.float32)
    w2 = jax.random.normal(k2, (HIDDEN, HIDDEN), jnp.float32) * (2.0 / HIDDEN) ** 0.5
    b2 = jnp.zeros((1, HIDDEN), jnp.float32)
    wmu = jax.random.normal(k3, (HIDDEN, ACT), jnp.float32) * 0.2 * (1.0 / HIDDEN) ** 0.5
    bmu = jnp.zeros((1, ACT), jnp.float32)
    return (w1, b1, w2, b2, wmu, bmu)


def reference_forward(obs, params):
    """Pure-JAX reference mirroring the kernel's bf16 rounding points."""
    w1, b1, w2, b2, wmu, bmu = params

    def bf(a):
        return a.astype(jnp.bfloat16).astype(jnp.float32)

    x = bf(obs)
    h = x @ bf(w1) + b1
    h = h * jax.nn.sigmoid(h)
    h = bf(h) @ bf(w2) + b2
    h = h * jax.nn.sigmoid(h)
    mu = bf(h) @ bf(wmu) + bmu
    return jnp.clip(mu, -3.0, 3.0) / 3.0


if __name__ == "__main__":
    key = jax.random.PRNGKey(0)
    kobs, kparam = jax.random.split(key)

    B = 50  # deliberately not a multiple of 8 to exercise the cdiv + padding path
    obs = jax.random.normal(kobs, (B, OBS), jnp.float32).astype(jnp.bfloat16)
    params = init_params(kparam)

    out = simple_actor_forward(obs, params)
    out = jax.block_until_ready(out)

    ref = reference_forward(obs.astype(jnp.float32), params)
    assert out[2].shape == (B, ACT), out[2].shape
    assert out[0].shape == (1,) and out[1].shape == (1,) and out[3].shape == (1,)
    assert jnp.allclose(out[2], ref, atol=2e-2, rtol=2e-2), (
        "mismatch vs reference, max abs err = "
        f"{float(jnp.max(jnp.abs(out[2] - ref)))}")
    print("KERNEL_OK")
</pallas_src>

<mosaic_0001>
module attributes {stable_mosaic.version = 11 : i64} {
  func.func @simple_actor_kernel(%arg0: i32, %arg1: memref<56x16xbf16, #tpu.memory_space<vmem>>, %arg2: memref<16x32xbf16, #tpu.memory_space<vmem>>, %arg3: memref<1x32xf32, #tpu.memory_space<vmem>>, %arg4: memref<32x32xbf16, #tpu.memory_space<vmem>>, %arg5: memref<1x32xf32, #tpu.memory_space<vmem>>, %arg6: memref<32x4xbf16, #tpu.memory_space<vmem>>, %arg7: memref<1x4xf32, #tpu.memory_space<vmem>>, %arg8: memref<56x4xf32, #tpu.memory_space<vmem>>) attributes {dimension_semantics = [#tpu.dimension_semantics<parallel>], iteration_bounds = array<i64: 1>, scalar_prefetch = 0 : i64, scratch_operands = 0 : i64, tpu.core_type = #tpu.core_type<tc>, window_params = [{transform_indices = @transform_0, window_bounds = array<i64: 56, 16>}, {pipeline_mode = #tpu.pipeline_mode<synchronous>, transform_indices = @transform_1, window_bounds = array<i64: 16, 32>}, {pipeline_mode = #tpu.pipeline_mode<synchronous>, transform_indices = @transform_2, window_bounds = array<i64: 1, 32>}, {pipeline_mode = #tpu.pipeline_mode<synchronous>, transform_indices = @transform_3, window_bounds = array<i64: 32, 32>}, {pipeline_mode = #tpu.pipeline_mode<synchronous>, transform_indices = @transform_4, window_bounds = array<i64: 1, 32>}, {pipeline_mode = #tpu.pipeline_mode<synchronous>, transform_indices = @transform_5, window_bounds = array<i64: 32, 4>}, {pipeline_mode = #tpu.pipeline_mode<synchronous>, transform_indices = @transform_6, window_bounds = array<i64: 1, 4>}, {transform_indices = @transform_7, window_bounds = array<i64: 56, 4>}]} {
    %c0 = arith.constant 0 : index
    %c0_0 = arith.constant 0 : index
    %0 = vector.load %arg1[%c0, %c0_0] : memref<56x16xbf16, #tpu.memory_space<vmem>>, vector<56x16xbf16>
    %c0_1 = arith.constant 0 : index
    %c0_2 = arith.constant 0 : index
    %1 = vector.load %arg2[%c0_1, %c0_2] : memref<16x32xbf16, #tpu.memory_space<vmem>>, vector<16x32xbf16>
    %cst = arith.constant dense<0.000000e+00> : vector<56x32xf32>
    %2 = tpu.matmul %0, %1, %cst {dimension_numbers = #tpu.dot_dimension_numbers<[1], [0], [0], [1], [0, 0, 1, 1], [], []>} : vector<56x16xbf16>, vector<16x32xbf16>, vector<56x32xf32> -> vector<56x32xf32>
    %c0_3 = arith.constant 0 : index
    %c0_4 = arith.constant 0 : index
    %3 = vector.load %arg3[%c0_3, %c0_4] : memref<1x32xf32, #tpu.memory_space<vmem>>, vector<1x32xf32>
    %4 = vector.broadcast %3 : vector<1x32xf32> to vector<56x32xf32>
    %5 = arith.addf %2, %4 : vector<56x32xf32>
    %cst_5 = arith.constant 0.000000e+00 : f32
    %6 = vector.broadcast %cst_5 : f32 to vector<56x32xf32>
    %7 = arith.subf %6, %5 : vector<56x32xf32>
    %8 = math.exp %7 : vector<56x32xf32>
    %cst_6 = arith.constant 1.000000e+00 : f32
    %9 = vector.broadcast %cst_6 : f32 to vector<56x32xf32>
    %10 = arith.addf %9, %8 : vector<56x32xf32>
    %11 = tpu.reciprocal %10 {approx = true} : vector<56x32xf32> -> vector<56x32xf32>
    %12 = arith.mulf %5, %11 : vector<56x32xf32>
    %13 = arith.truncf %12 : vector<56x32xf32> to vector<56x32xbf16>
    %c0_7 = arith.constant 0 : index
    %c0_8 = arith.constant 0 : index
    %14 = vector.load %arg4[%c0_7, %c0_8] : memref<32x32xbf16, #tpu.memory_space<vmem>>, vector<32x32xbf16>
    %cst_9 = arith.constant dense<0.000000e+00> : vector<56x32xf32>
    %15 = tpu.matmul %13, %14, %cst_9 {dimension_numbers = #tpu.dot_dimension_numbers<[1], [0], [0], [1], [0, 0, 1, 1], [], []>} : vector<56x32xbf16>, vector<32x32xbf16>, vector<56x32xf32> -> vector<56x32xf32>
    %c0_10 = arith.constant 0 : index
    %c0_11 = arith.constant 0 : index
    %16 = vector.load %arg5[%c0_10, %c0_11] : memref<1x32xf32, #tpu.memory_space<vmem>>, vector<1x32xf32>
    %17 = vector.broadcast %16 : vector<1x32xf32> to vector<56x32xf32>
    %18 = arith.addf %15, %17 : vector<56x32xf32>
    %cst_12 = arith.constant 0.000000e+00 : f32
    %19 = vector.broadcast %cst_12 : f32 to vector<56x32xf32>
    %20 = arith.subf %19, %18 : vector<56x32xf32>
    %21 = math.exp %20 : vector<56x32xf32>
    %cst_13 = arith.constant 1.000000e+00 : f32
    %22 = vector.broadcast %cst_13 : f32 to vector<56x32xf32>
    %23 = arith.addf %22, %21 : vector<56x32xf32>
    %24 = tpu.reciprocal %23 {approx = true} : vector<56x32xf32> -> vector<56x32xf32>
    %25 = arith.mulf %18, %24 : vector<56x32xf32>
    %26 = arith.truncf %25 : vector<56x32xf32> to vector<56x32xbf16>
    %c0_14 = arith.constant 0 : index
    %c0_15 = arith.constant 0 : index
    %27 = vector.load %arg6[%c0_14, %c0_15] : memref<32x4xbf16, #tpu.memory_space<vmem>>, vector<32x4xbf16>
    %cst_16 = arith.constant dense<0.000000e+00> : vector<56x4xf32>
    %28 = tpu.matmul %26, %27, %cst_16 {dimension_numbers = #tpu.dot_dimension_numbers<[1], [0], [0], [1], [0, 0, 1, 1], [], []>} : vector<56x32xbf16>, vector<32x4xbf16>, vector<56x4xf32> -> vector<56x4xf32>
    %c0_17 = arith.constant 0 : index
    %c0_18 = arith.constant 0 : index
    %29 = vector.load %arg7[%c0_17, %c0_18] : memref<1x4xf32, #tpu.memory_space<vmem>>, vector<1x4xf32>
    %30 = vector.broadcast %29 : vector<1x4xf32> to vector<56x4xf32>
    %31 = arith.addf %28, %30 : vector<56x4xf32>
    %cst_19 = arith.constant -3.000000e+00 : f32
    %cst_20 = arith.constant 3.000000e+00 : f32
    %32 = vector.broadcast %cst_19 : f32 to vector<56x4xf32>
    %33 = arith.maximumf %32, %31 : vector<56x4xf32>
    %34 = vector.broadcast %cst_20 : f32 to vector<56x4xf32>
    %35 = arith.minimumf %34, %33 : vector<56x4xf32>
    %cst_21 = arith.constant 0.333333343 : f32
    %36 = vector.broadcast %cst_21 : f32 to vector<56x4xf32>
    %37 = arith.mulf %35, %36 : vector<56x4xf32>
    %c0_22 = arith.constant 0 : index
    %c0_23 = arith.constant 0 : index
    %38 = vector.load %arg8[%c0_22, %c0_23] : memref<56x4xf32, #tpu.memory_space<vmem>>, vector<56x4xf32>
    tpu.vector_store %arg8[%c0_22, %c0_23], %37 {strides = array<i32>} : memref<56x4xf32, #tpu.memory_space<vmem>>, vector<56x4xf32>,
    return
  }
  func.func @transform_0(%arg0: i32) -> (i32, i32) {
    %c0_i32 = arith.constant 0 : i32
    %c0_i32_0 = arith.constant 0 : i32
    return %arg0, %c0_i32 : i32, i32
  }
  func.func @transform_1(%arg0: i32) -> (i32, i32) {
    %c0_i32 = arith.constant 0 : i32
    %c0_i32_0 = arith.constant 0 : i32
    %c0_i32_1 = arith.constant 0 : i32
    return %c0_i32, %c0_i32_0 : i32, i32
  }
  func.func @transform_2(%arg0: i32) -> (i32, i32) {
    %c0_i32 = arith.constant 0 : i32
    %c0_i32_0 = arith.constant 0 : i32
    %c0_i32_1 = arith.constant 0 : i32
    return %c0_i32, %c0_i32_0 : i32, i32
  }
  func.func @transform_3(%arg0: i32) -> (i32, i32) {
    %c0_i32 = arith.constant 0 : i32
    %c0_i32_0 = arith.constant 0 : i32
    %c0_i32_1 = arith.constant 0 : i32
    return %c0_i32, %c0_i32_0 : i32, i32
  }
  func.func @transform_4(%arg0: i32) -> (i32, i32) {
    %c0_i32 = arith.constant 0 : i32
    %c0_i32_0 = arith.constant 0 : i32
    %c0_i32_1 = arith.constant 0 : i32
    return %c0_i32, %c0_i32_0 : i32, i32
  }
  func.func @transform_5(%arg0: i32) -> (i32, i32) {
    %c0_i32 = arith.constant 0 : i32
    %c0_i32_0 = arith.constant 0 : i32
    %c0_i32_1 = arith.constant 0 : i32
    return %c0_i32, %c0_i32_0 : i32, i32
  }
  func.func @transform_6(%arg0: i32) -> (i32, i32) {
    %c0_i32 = arith.constant 0 : i32
    %c0_i32_0 = arith.constant 0 : i32
    %c0_i32_1 = arith.constant 0 : i32
    return %c0_i32, %c0_i32_0 : i32, i32
  }
  func.func @transform_7(%arg0: i32) -> (i32, i32) {
    %c0_i32 = arith.constant 0 : i32
    %c0_i32_0 = arith.constant 0 : i32
    return %arg0, %c0_i32 : i32, i32
  }
}

</mosaic_0001>

<llo_original>
// kernel: simple_actor_forward.1
$region0: #{simple_actor_forward.1}
  #allocation0 [shape = 'u32[]', space=smem, size = 0x4, offset = 0x4, fixed_abs, tag = 'smem constant byte address 0x4 - core index']
  #allocation1 [shape = 'u32[144,128]{1,0:T(1,128)}', space=vmem, size = 0x12000, scoped, tag = 'internal scratch']
  %s0 = inlined_call_operand.vmem [shape: bf16[56,16], index: 0, kind: input, shape index: {}]
  %s1 = inlined_call_operand.vmem [shape: bf16[16,32], index: 1, kind: input, shape index: {}]
  %s2 = inlined_call_operand.vmem [shape: f32[1,32], index: 2, kind: input, shape index: {}]
  %s3 = inlined_call_operand.vmem [shape: bf16[32,32], index: 3, kind: input, shape index: {}]
  %s4 = inlined_call_operand.vmem [shape: f32[1,32], index: 4, kind: input, shape index: {}]
  %s5 = inlined_call_operand.vmem [shape: bf16[32,4], index: 5, kind: input, shape index: {}]
  %s6 = inlined_call_operand.vmem [shape: f32[1,4], index: 6, kind: input, shape index: {}]
  %s7 = inlined_call_operand.vmem [shape: f32[56,4], index: 7, kind: output, shape index: {}]
  %s8 = sld [smem:[#allocation0]]
  $region38: #{simple_actor_forward.1} parent=0
    _
  %s10 = ssub.s32 1, %s8
  %s11 = scalar_select 0, %s10, %s8
  // Predicated region
  $region2: #{simple_actor_forward.1} parent=0 // pred_check
    _
  $region3: #{simple_actor_forward.1} parent=0 // pred_check_branch
    %13 = sbr.rel (0) target = $region5
  $region4: #{simple_actor_forward.1} parent=0 // pred_region
    _
  $region5: #{simple_actor_forward.1} parent=0 // pred_fallthru
    _
  // Predicated region
  $region6: #{simple_actor_forward.1} parent=0 // pred_check
    _
  $region7: #{simple_actor_forward.1} parent=0 // pred_check_branch
    %15 = sbr.rel (0) target = $region9
  $region8: #{simple_actor_forward.1} parent=0 // pred_region
    _
  $region9: #{simple_actor_forward.1} parent=0 // pred_fallthru
    _
  // Predicated region
  $region10: #{simple_actor_forward.1} parent=0 // pred_check
    _
  $region11: #{simple_actor_forward.1} parent=0 // pred_check_branch
    %17 = sbr.rel (0) target = $region13
  $region12: #{simple_actor_forward.1} parent=0 // pred_region
    _
  $region13: #{simple_actor_forward.1} parent=0 // pred_fallthru
    _
  // Predicated region
  $region14: #{simple_actor_forward.1} parent=0 // pred_check
    _
  $region15: #{simple_actor_forward.1} parent=0 // pred_check_branch
    %19 = sbr.rel (0) target = $region17
  $region16: #{simple_actor_forward.1} parent=0 // pred_region
    _
  $region17: #{simple_actor_forward.1} parent=0 // pred_fallthru
    _
  // Predicated region
  $region18: #{simple_actor_forward.1} parent=0 // pred_check
    _
  $region19: #{simple_actor_forward.1} parent=0 // pred_check_branch
    %21 = sbr.rel (0) target = $region21
  $region20: #{simple_actor_forward.1} parent=0 // pred_region
    _
  $region21: #{simple_actor_forward.1} parent=0 // pred_fallthru
    _
  // Predicated region
  $region22: #{simple_actor_forward.1} parent=0 // pred_check
    _
  $region23: #{simple_actor_forward.1} parent=0 // pred_check_branch
    %23 = sbr.rel (0) target = $region25
  $region24: #{simple_actor_forward.1} parent=0 // pred_region
    _
  $region25: #{simple_actor_forward.1} parent=0 // pred_fallthru
    _
  // Predicated region
  $region26: #{simple_actor_forward.1} parent=0 // pred_check
    _
  $region27: #{simple_actor_forward.1} parent=0 // pred_check_branch
    %25 = sbr.rel (0) target = $region29
  $region28: #{simple_actor_forward.1} parent=0 // pred_region
    _
  $region29: #{simple_actor_forward.1} parent=0 // pred_fallthru
    _
  %v27 = vld [vmem:[%s0] sm:$0xf]
  %v28 = vld [vmem:[%s0 + $0x4] sm:$0xf]
  %v29 = vld [vmem:[%s0 + $0x8] sm:$0xf]
  %v30 = vld [vmem:[%s0 + $0xc] sm:$0xf]
  %v31 = vld [vmem:[%s0 + $0x10] sm:$0xf]
  %v32 = vld [vmem:[%s0 + $0x14] sm:$0xf]
  %v33 = vld [vmem:[%s0 + $0x18] sm:$0xf]
  %v34 = vld [vmem:[%s1] sm:$0xf]
  %v35 = vld [vmem:[%s1 + $0x4] sm:$0xf]
  %v36 = vld [vmem:[%s2] sm:$0x1]
  %v38 = vlaneseq
  %v39 = vshrl.u32 %v38, 7
  %v40 = vsub.s32 0, %v39
  %v41 = vrot.slane %v36, %v40
  %v50 = vunpack.c.l.b16 %v27
  %v51 = vunpack.c.l.b16 %v28
  %v52 = vunpack.c.l.b16 %v29
  %v53 = vunpack.c.l.b16 %v30
  %v54 = vunpack.c.l.b16 %v31
  %v55 = vunpack.c.l.b16 %v32
  %v56 = vunpack.c.l.b16 %v33
  %v57 = vpack.c.b16 %v51, %v50
  %v58 = vpack.c.b16 %v53, %v52
  %v59 = vpack.c.b16 %v55, %v54
  %v60 = vpack.c.b16 %v56, %v56
  %v63 = vunpack.c.l.b16 %v34
  %v64 = vunpack.c.l.b16 %v35
  %v65 = vpack.c.b16 %v64, %v63
  %vm67 = vcmask 130048
  %v69 = vsel %vm67, %v57, 0
  %v72 = vsel %vm67, %v58, 0
  %v75 = vsel %vm67, %v59, 0
  %v78 = vsel %vm67, %v60, 0
  %80 = vmatprep.subr.bf16.mxu0 0
  %81 = vmatpush1.bf16.msra.mxu0 0
  %82 = vmatprep.subr.bf16.mxu0 0
  %83 = vmatpush1.bf16.msra.mxu0 0
  %84 = vmatprep.subr.bf16.mxu0 0
  %85 = vmatpush1.bf16.msra.mxu0 0
  %86 = vmatprep.subr.bf16.mxu0 0
  %87 = vmatpush1.bf16.msra.mxu0 0
  %88 = vmatprep.subr.bf16.mxu0 0
  %89 = vmatpush1.bf16.msra.mxu0 0
  %90 = vmatprep.subr.bf16.mxu0 0
  %91 = vmatpush1.bf16.msra.mxu0 0
  %92 = vmatprep.subr.bf16.mxu0 0
  %93 = vmatpush1.bf16.msra.mxu0 0
  %94 = vmatprep.subr.bf16.mxu0 0
  %95 = vmatpush1.bf16.msra.mxu0 %v65
  %96 = vmatprep.subr.bf16.mxu0 0
  %97 = vmatpush2.bf16.msra.mxu0 0
  %98 = vmatprep.subr.bf16.mxu0 0
  %99 = vmatpush2.bf16.msra.mxu0 0
  %100 = vmatprep.subr.bf16.mxu0 0
  %101 = vmatpush2.bf16.msra.mxu0 0
  %102 = vmatprep.subr.bf16.mxu0 0
  %103 = vmatpush2.bf16.msra.mxu0 0
  %104 = vmatprep.subr.bf16.mxu0 0
  %105 = vmatpush2.bf16.msra.mxu0 0
  %106 = vmatprep.subr.bf16.mxu0 0
  %107 = vmatpush2.bf16.msra.mxu0 0
  %108 = vmatprep.subr.bf16.mxu0 0
  %109 = vmatpush2.bf16.msra.mxu0 0
  %110 = vmatprep.subr.bf16.mxu0 0
  %111 = vmatpush2.bf16.msra.mxu0 0
  %112 = vmatprep.mubr.bf16.mxu0 0
  %113 = vmatmul.mubr.bf16.gmra.mxu0 %v69
  %v114 = vpop.f32.mrf.mxu0
  %v115 = vadd.f32 %v41, %v114
  %v116 = vpop.f32.mrf.mxu0
  %v117 = vpop.f32.mrf.mxu0
  %v118 = vadd.f32 %v41, %v117
  %v119 = vpop.f32.mrf.mxu0
  %120 = vmatprep.mubr.bf16.mxu0 0
  %121 = vmatmul.mubr.bf16.gmra.mxu0 %v72
  %v122 = vpop.f32.mrf.mxu0
  %v123 = vadd.f32 %v41, %v122
  %v124 = vpop.f32.mrf.mxu0
  %v125 = vpop.f32.mrf.mxu0
  %v126 = vadd.f32 %v41, %v125
  %v127 = vpop.f32.mrf.mxu0
  %128 = vmatprep.mubr.bf16.mxu0 0
  %129 = vmatmul.mubr.bf16.gmra.mxu0 %v75
  %v130 = vpop.f32.mrf.mxu0
  %v131 = vadd.f32 %v41, %v130
  %v132 = vpop.f32.mrf.mxu0
  %v133 = vpop.f32.mrf.mxu0
  %v134 = vadd.f32 %v41, %v133
  %v135 = vpop.f32.mrf.mxu0
  %136 = vmatprep.mubr.bf16.mxu0 0
  %137 = vmatmul.mubr.bf16.gmra.mxu0 %v78
  %v138 = vpop.f32.mrf.mxu0
  %v139 = vadd.f32 %v41, %v138
  %v140 = vpop.f32.mrf.mxu0
  %v141 = vpop.f32.mrf.mxu0
  %v142 = vpop.f32.mrf.mxu0
  %143 = vdwg.mxu0
  %v144 = vsub.f32 0.0, %v115
  %v145 = vsub.f32 0.0, %v118
  %v146 = vsub.f32 0.0, %v123
  %v147 = vsub.f32 0.0, %v126
  %v148 = vsub.f32 0.0, %v131
  %v149 = vsub.f32 0.0, %v134
  %v150 = vsub.f32 0.0, %v139
  %v151 = vmul.f32 %v144, 1.442695
  %v152 = vpow.pop %v151
  %v153 = vmul.f32 %v145, 1.442695
  %v154 = vpow.pop %v153
  %v155 = vmul.f32 %v146, 1.442695
  %v156 = vpow.pop %v155
  %v157 = vmul.f32 %v147, 1.442695
  %v158 = vpow.pop %v157
  %v159 = vmul.f32 %v148, 1.442695
  %v160 = vpow.pop %v159
  %v161 = vmul.f32 %v149, 1.442695
  %v162 = vpow.pop %v161
  %v163 = vmul.f32 %v150, 1.442695
  %v164 = vpow.pop %v163
  %v165 = vadd.f32 %v152, 1.0
  %v166 = vadd.f32 %v154, 1.0
  %v167 = vadd.f32 %v156, 1.0
  %v168 = vadd.f32 %v158, 1.0
  %v169 = vadd.f32 %v160, 1.0
  %v170 = vadd.f32 %v162, 1.0
  %v171 = vadd.f32 %v164, 1.0
  %v172 = vrcp.pop %v165
  %v173 = vrcp.pop %v166
  %v174 = vrcp.pop %v167
  %v175 = vrcp.pop %v168
  %v176 = vrcp.pop %v169
  %v177 = vrcp.pop %v170
  %v178 = vrcp.pop %v171
  %v179 = vmul.f32 %v115, %v172
  %v180 = vmul.f32 %v118, %v173
  %v181 = vmul.f32 %v123, %v174
  %v182 = vmul.f32 %v126, %v175
  %v183 = vmul.f32 %v131, %v176
  %v184 = vmul.f32 %v134, %v177
  %v185 = vmul.f32 %v139, %v178
  %v186 = vpack.c.bf16 %v180, %v179
  %v187 = vpack.c.bf16 %v182, %v181
  %v188 = vpack.c.bf16 %v184, %v183
  %v189 = vpack.c.bf16 %v185, %v185
  %v190 = vld [vmem:[%s3] sm:$0xf]
  %v191 = vld [vmem:[%s3 + $0x4] sm:$0xf]
  %v192 = vld [vmem:[%s3 + $0x8] sm:$0xf]
  %v193 = vld [vmem:[%s3 + $0xc] sm:$0xf]
  %v194 = vld [vmem:[%s4] sm:$0x1]
  %v196 = vlaneseq
  %v197 = vshrl.u32 %v196, 7
  %v198 = vsub.s32 0, %v197
  %v199 = vrot.slane %v194, %v198
  %v205 = vunpack.c.l.b16 %v190
  %v206 = vunpack.c.l.b16 %v191
  %v207 = vunpack.c.l.b16 %v192
  %v208 = vunpack.c.l.b16 %v193
  %v209 = vpack.c.b16 %v206, %v205
  %v210 = vpack.c.b16 %v208, %v207
  %vm213 = vcmask 261120
  %v215 = vsel %vm213, %v186, 0
  %v218 = vsel %vm213, %v187, 0
  %v221 = vsel %vm213, %v188, 0
  %v224 = vsel %vm213, %v189, 0
  %226 = vmatprep.subr.bf16.mxu0 0
  %227 = vmatpush1.bf16.msra.mxu0 0
  %228 = vmatprep.subr.bf16.mxu0 0
  %229 = vmatpush1.bf16.msra.mxu0 0
  %230 = vmatprep.subr.bf16.mxu0 0
  %231 = vmatpush1.bf16.msra.mxu0 0
  %232 = vmatprep.subr.bf16.mxu0 0
  %233 = vmatpush1.bf16.msra.mxu0 0
  %234 = vmatprep.subr.bf16.mxu0 0
  %235 = vmatpush1.bf16.msra.mxu0 0
  %236 = vmatprep.subr.bf16.mxu0 0
  %237 = vmatpush1.bf16.msra.mxu0 0
  %238 = vmatprep.subr.bf16.mxu0 0
  %239 = vmatpush1.bf16.msra.mxu0 %v210
  %240 = vmatprep.subr.bf16.mxu0 0
  %241 = vmatpush1.bf16.msra.mxu0 %v209
  %242 = vmatprep.subr.bf16.mxu0 0
  %243 = vmatpush2.bf16.msra.mxu0 0
  %244 = vmatprep.subr.bf16.mxu0 0
  %245 = vmatpush2.bf16.msra.mxu0 0
  %246 = vmatprep.subr.bf16.mxu0 0
  %247 = vmatpush2.bf16.msra.mxu0 0
  %248 = vmatprep.subr.bf16.mxu0 0
  %249 = vmatpush2.bf16.msra.mxu0 0
  %250 = vmatprep.subr.bf16.mxu0 0
  %251 = vmatpush2.bf16.msra.mxu0 0
  %252 = vmatprep.subr.bf16.mxu0 0
  %253 = vmatpush2.bf16.msra.mxu0 0
  %254 = vmatprep.subr.bf16.mxu0 0
  %255 = vmatpush2.bf16.msra.mxu0 0
  %256 = vmatprep.subr.bf16.mxu0 0
  %257 = vmatpush2.bf16.msra.mxu0 0
  %258 = vmatprep.mubr.bf16.mxu0 0
  %259 = vmatmul.mubr.bf16.gmra.mxu0 %v215
  %v260 = vpop.f32.mrf.mxu0
  %v261 = vadd.f32 %v199, %v260
  %v262 = vpop.f32.mrf.mxu0
  %v263 = vpop.f32.mrf.mxu0
  %v264 = vadd.f32 %v199, %v263
  %v265 = vpop.f32.mrf.mxu0
  %266 = vmatprep.mubr.bf16.mxu0 0
  %267 = vmatmul.mubr.bf16.gmra.mxu0 %v218
  %v268 = vpop.f32.mrf.mxu0
  %v269 = vadd.f32 %v199, %v268
  %v270 = vpop.f32.mrf.mxu0
  %v271 = vpop.f32.mrf.mxu0
  %v272 = vadd.f32 %v199, %v271
  %v273 = vpop.f32.mrf.mxu0
  %274 = vmatprep.mubr.bf16.mxu0 0
  %275 = vmatmul.mubr.bf16.gmra.mxu0 %v221
  %v276 = vpop.f32.mrf.mxu0
  %v277 = vadd.f32 %v199, %v276
  %v278 = vpop.f32.mrf.mxu0
  %v279 = vpop.f32.mrf.mxu0
  %v280 = vadd.f32 %v199, %v279
  %v281 = vpop.f32.mrf.mxu0
  %282 = vmatprep.mubr.bf16.mxu0 0
  %283 = vmatmul.mubr.bf16.gmra.mxu0 %v224
  %v284 = vpop.f32.mrf.mxu0
  %v285 = vadd.f32 %v199, %v284
  %v286 = vpop.f32.mrf.mxu0
  %v287 = vpop.f32.mrf.mxu0
  %v288 = vpop.f32.mrf.mxu0
  %289 = vdwg.mxu0
  %v290 = vsub.f32 0.0, %v261
  %v291 = vsub.f32 0.0, %v264
  %v292 = vsub.f32 0.0, %v269
  %v293 = vsub.f32 0.0, %v272
  %v294 = vsub.f32 0.0, %v277
  %v295 = vsub.f32 0.0, %v280
  %v296 = vsub.f32 0.0, %v285
  %v297 = vmul.f32 %v290, 1.442695
  %v298 = vpow.pop %v297
  %v299 = vmul.f32 %v291, 1.442695
  %v300 = vpow.pop %v299
  %v301 = vmul.f32 %v292, 1.442695
  %v302 = vpow.pop %v301
  %v303 = vmul.f32 %v293, 1.442695
  %v304 = vpow.pop %v303
  %v305 = vmul.f32 %v294, 1.442695
  %v306 = vpow.pop %v305
  %v307 = vmul.f32 %v295, 1.442695
  %v308 = vpow.pop %v307
  %v309 = vmul.f32 %v296, 1.442695
  %v310 = vpow.pop %v309
  %v311 = vadd.f32 %v298, 1.0
  %v312 = vadd.f32 %v300, 1.0
  %v313 = vadd.f32 %v302, 1.0
  %v314 = vadd.f32 %v304, 1.0
  %v315 = vadd.f32 %v306, 1.0
  %v316 = vadd.f32 %v308, 1.0
  %v317 = vadd.f32 %v310, 1.0
  %v318 = vrcp.pop %v311
  %v319 = vrcp.pop %v312
  %v320 = vrcp.pop %v313
  %v321 = vrcp.pop %v314
  %v322 = vrcp.pop %v315
  %v323 = vrcp.pop %v316
  %v324 = vrcp.pop %v317
  %v325 = vmul.f32 %v261, %v318
  %v326 = vmul.f32 %v264, %v319
  %v327 = vmul.f32 %v269, %v320
  %v328 = vmul.f32 %v272, %v321
  %v329 = vmul.f32 %v277, %v322
  %v330 = vmul.f32 %v280, %v323
  %v331 = vmul.f32 %v285, %v324
  %v332 = vpack.c.bf16 %v326, %v325
  %v333 = vpack.c.bf16 %v328, %v327
  %v334 = vpack.c.bf16 %v330, %v329
  %v335 = vpack.c.bf16 %v331, %v331
  %v336 = vld [vmem:[%s5] sm:$0xf]
  %v337 = vld [vmem:[%s5 + $0x4] sm:$0xf]
  %v338 = vld [vmem:[%s5 + $0x8] sm:$0xf]
  %v339 = vld [vmem:[%s5 + $0xc] sm:$0xf]
  %v340 = vld [vmem:[%s6] sm:$0x1]
  %v342 = vlaneseq
  %v343 = vshrl.u32 %v342, 7
  %v344 = vsub.s32 0, %v343
  %v345 = vrot.slane %v340, %v344
  %v351 = vunpack.c.l.b16 %v336
  %v352 = vunpack.c.l.b16 %v337
  %v353 = vunpack.c.l.b16 %v338
  %v354 = vunpack.c.l.b16 %v339
  %v355 = vpack.c.b16 %v352, %v351
  %v356 = vpack.c.b16 %v354, %v353
  %v360 = vsel %vm213, %v332, 0
  %v363 = vsel %vm213, %v333, 0
  %v366 = vsel %vm213, %v334, 0
  %v369 = vsel %vm213, %v335, 0
  %371 = vmatprep.subr.bf16.mxu0 0
  %372 = vmatpush1.bf16.msra.mxu0 0
  %373 = vmatprep.subr.bf16.mxu0 0
  %374 = vmatpush1.bf16.msra.mxu0 0
  %375 = vmatprep.subr.bf16.mxu0 0
  %376 = vmatpush1.bf16.msra.mxu0 0
  %377 = vmatprep.subr.bf16.mxu0 0
  %378 = vmatpush1.bf16.msra.mxu0 0
  %379 = vmatprep.subr.bf16.mxu0 0
  %380 = vmatpush1.bf16.msra.mxu0 0
  %381 = vmatprep.subr.bf16.mxu0 0
  %382 = vmatpush1.bf16.msra.mxu0 0
  %383 = vmatprep.subr.bf16.mxu0 0
  %384 = vmatpush1.bf16.msra.mxu0 %v356
  %385 = vmatprep.subr.bf16.mxu0 0
  %386 = vmatpush1.bf16.msra.mxu0 %v355
  %387 = vmatprep.subr.bf16.mxu0 0
  %388 = vmatpush2.bf16.msra.mxu0 0
  %389 = vmatprep.subr.bf16.mxu0 0
  %390 = vmatpush2.bf16.msra.mxu0 0
  %391 = vmatprep.subr.bf16.mxu0 0
  %392 = vmatpush2.bf16.msra.mxu0 0
  %393 = vmatprep.subr.bf16.mxu0 0
  %394 = vmatpush2.bf16.msra.mxu0 0
  %395 = vmatprep.subr.bf16.mxu0 0
  %396 = vmatpush2.bf16.msra.mxu0 0
  %397 = vmatprep.subr.bf16.mxu0 0
  %398 = vmatpush2.bf16.msra.mxu0 0
  %399 = vmatprep.subr.bf16.mxu0 0
  %400 = vmatpush2.bf16.msra.mxu0 0
  %401 = vmatprep.subr.bf16.mxu0 0
  %402 = vmatpush2.bf16.msra.mxu0 0
  %403 = vmatprep.mubr.bf16.mxu0 0
  %404 = vmatmul.mubr.bf16.gmra.mxu0 %v360
  %v405 = vpop.f32.mrf.mxu0
  %v406 = vadd.f32 %v345, %v405
  %v407 = vpop.f32.mrf.mxu0
  %v408 = vpop.f32.mrf.mxu0
  %v409 = vadd.f32 %v345, %v408
  %v410 = vpop.f32.mrf.mxu0
  %411 = vmatprep.mubr.bf16.mxu0 0
  %412 = vmatmul.mubr.bf16.gmra.mxu0 %v363
  %v413 = vpop.f32.mrf.mxu0
  %v414 = vadd.f32 %v345, %v413
  %v415 = vpop.f32.mrf.mxu0
  %v416 = vpop.f32.mrf.mxu0
  %v417 = vadd.f32 %v345, %v416
  %v418 = vpop.f32.mrf.mxu0
  %419 = vmatprep.mubr.bf16.mxu0 0
  %420 = vmatmul.mubr.bf16.gmra.mxu0 %v366
  %v421 = vpop.f32.mrf.mxu0
  %v422 = vadd.f32 %v345, %v421
  %v423 = vpop.f32.mrf.mxu0
  %v424 = vpop.f32.mrf.mxu0
  %v425 = vadd.f32 %v345, %v424
  %v426 = vpop.f32.mrf.mxu0
  %427 = vmatprep.mubr.bf16.mxu0 0
  %428 = vmatmul.mubr.bf16.gmra.mxu0 %v369
  %v429 = vpop.f32.mrf.mxu0
  %v430 = vadd.f32 %v345, %v429
  %v431 = vpop.f32.mrf.mxu0
  %v432 = vpop.f32.mrf.mxu0
  %v433 = vpop.f32.mrf.mxu0
  %434 = vdwg.mxu0
  %v435 = vmax.f32 %v406, -3.0
  %v436 = vmax.f32 %v409, -3.0
  %v437 = vmax.f32 %v414, -3.0
  %v438 = vmax.f32 %v417, -3.0
  %v439 = vmax.f32 %v422, -3.0
  %v440 = vmax.f32 %v425, -3.0
  %v441 = vmax.f32 %v430, -3.0
  %v442 = vmin.f32 %v435, 3.0
  %v443 = vmin.f32 %v436, 3.0
  %v444 = vmin.f32 %v437, 3.0
  %v445 = vmin.f32 %v438, 3.0
  %v446 = vmin.f32 %v439, 3.0
  %v447 = vmin.f32 %v440, 3.0
  %v448 = vmin.f32 %v441, 3.0
  %v449 = vmul.f32 %v442, 0.33333334
  %v450 = vmul.f32 %v443, 0.33333334
  %v451 = vmul.f32 %v444, 0.33333334
  %v452 = vmul.f32 %v445, 0.33333334
  %v453 = vmul.f32 %v446, 0.33333334
  %v454 = vmul.f32 %v447, 0.33333334
  %v455 = vmul.f32 %v448, 0.33333334
  %vm456 = vcmask 31744
  %457 = vst.msk [vmem:[%s7] sm:$0xff] %vm456, %v449
  %458 = vst.msk [vmem:[%s7 + $0x8] sm:$0xff] %vm456, %v450
  %459 = vst.msk [vmem:[%s7 + $0x10] sm:$0xff] %vm456, %v451
  %460 = vst.msk [vmem:[%s7 + $0x18] sm:$0xff] %vm456, %v452
  %461 = vst.msk [vmem:[%s7 + $0x20] sm:$0xff] %vm456, %v453
  %462 = vst.msk [vmem:[%s7 + $0x28] sm:$0xff] %vm456, %v454
  %463 = vst.msk [vmem:[%s7 + $0x30] sm:$0xff] %vm456, %v455
  // Predicated region
  $region30: #{simple_actor_forward.1} parent=0 // pred_check
    _
  $region31: #{simple_actor_forward.1} parent=0 // pred_check_branch
    %465 = sbr.rel (0) target = $region33
  $region32: #{simple_actor_forward.1} parent=0 // pred_region
    _
  $region33: #{simple_actor_forward.1} parent=0 // pred_fallthru
    _
  // Predicated region
  $region34: #{simple_actor_forward.1} parent=0 // pred_check
    _
  $region35: #{simple_actor_forward.1} parent=0 // pred_check_branch
    %467 = sbr.rel (0) target = $region37
  $region36: #{simple_actor_forward.1} parent=0 // pred_region
    _
  $region37: #{simple_actor_forward.1} parent=0 // pred_fallthru
    _

</llo_original>
